<compile_context>
chip_gen: v7x
topology: tpu7x:2x2x1
jax: 0.10.0
libtpu: 0.0.40
codegen_flags: <defaults>
</compile_context>

<pallas_src>
import functools

import jax
import jax.numpy as jnp
from jax.experimental import pallas as pl
from jax.experimental.pallas import tpu as pltpu

NUM_HID = 1024   # fixed by the module (self.num_hid)
FC_DIM = 512     # fixed by the module (self.fc)

# <= 64 MiB physical VMEM on v7x; also fine on v5e/v6e (128 MiB).
VMEM_LIMIT_BYTES = 48 * 1024 * 1024


def _round_up(x, m):
    return ((x + m - 1) // m) * m


def _pad2(a, rows, cols):
    r, c = a.shape
    if r == rows and c == cols:
        return a
    return jnp.pad(a, ((0, rows - r), (0, cols - c)))


def _maybe_buffered(n):
    # Single-buffer resident (constant-index) blocks when the API is available.
    if hasattr(pl, "Buffered"):
        try:
            return {"pipeline_mode": pl.Buffered(n)}
        except Exception:
            return {}
    return {}


# ----------------------------- tiled dense (matmul + bias) kernel -------------
def _matmul_bias_kernel(x_ref, wT_ref, b_ref, o_ref, acc_ref, *, relu):
    k = pl.program_id(2)

    @pl.when(k == 0)
    def _():
        acc_ref[...] = jnp.zeros_like(acc_ref)

    acc_ref[...] += jnp.dot(x_ref[...], wT_ref[...],
                            preferred_element_type=jnp.float32)

    @pl.when(k == pl.num_programs(2) - 1)
    def _():
        y = acc_ref[...] + b_ref[...]
        if relu:
            y = jnp.maximum(y, 0.0)
        o_ref[...] = y.astype(o_ref.dtype)


def dense(x, wT, b, relu=False, *, tm=256, tn=512, tk=512):
    """x: (M, K) f32, wT: (K, N_out) pre-transposed, b: (N_out,). Returns (M, N_out)."""
    M, K = x.shape
    n_out = wT.shape[1]
    tm = min(tm, _round_up(M, 8))
    tn = min(tn, _round_up(n_out, 128))
    tk = min(tk, _round_up(K, 128))
    Mp, Kp, Np = _round_up(M, tm), _round_up(K, tk), _round_up(n_out, tn)
    xp = _pad2(x, Mp, Kp)
    wTp = _pad2(wT, Kp, Np)
    bp = _pad2(b.reshape(1, -1), 1, Np)

    out = pl.pallas_call(
        functools.partial(_matmul_bias_kernel, relu=relu),
        out_shape=jax.ShapeDtypeStruct((Mp, Np), jnp.float32),
        grid_spec=pltpu.PrefetchScalarGridSpec(
            num_scalar_prefetch=0,
            grid=(Mp // tm, Np // tn, Kp // tk),
            in_specs=[pl.BlockSpec((tm, tk), lambda i, j, k: (i, k)),
                      pl.BlockSpec((tk, tn), lambda i, j, k: (k, j)),
                      pl.BlockSpec((1, tn), lambda i, j, k: (0, j))],
            out_specs=pl.BlockSpec((tm, tn), lambda i, j, k: (i, j)),
            scratch_shapes=[pltpu.VMEM((tm, tn), jnp.float32)]),
        compiler_params=pltpu.CompilerParams(
            dimension_semantics=("parallel", "parallel", "arbitrary"),
            vmem_limit_bytes=VMEM_LIMIT_BYTES),
    )(xp, wTp, bp)
    return out[:M, :n_out]


# ----------------------------- fused FC(1024->512)+ReLU + classifier ----------
def _fc_cls_kernel(h_ref, wfcT_ref, bfc_ref, wclsT_ref, bcls_ref, o_ref, fc_sc):
    # Compute the FC+ReLU tile once per row-block; it stays in VMEM scratch while
    # we stream over vocab tiles of W_cls (no HBM round trip for the FC activation).
    @pl.when(pl.program_id(1) == 0)
    def _():
        fc = jnp.dot(h_ref[...], wfcT_ref[...], preferred_element_type=jnp.float32)
        fc_sc[...] = jnp.maximum(fc + bfc_ref[...], 0.0)

    o_ref[...] = (jnp.dot(fc_sc[...], wclsT_ref[...],
                          preferred_element_type=jnp.float32)
                  + bcls_ref[...]).astype(o_ref.dtype)


def fc_classifier(h, wfcT, bfc, wclsT, bcls, *, tm=256, tv=512):
    """h: (M, 1024); wfcT: (1024, 512); wclsT: (512, V). Returns logits (M, V)."""
    M, H = h.shape
    F = wfcT.shape[1]
    V = wclsT.shape[1]
    tm = min(tm, _round_up(M, 8))
    tv = min(tv, _round_up(V, 128))
    Mp, Vp = _round_up(M, tm), _round_up(V, tv)
    hp = _pad2(h, Mp, H)
    wclsTp = _pad2(wclsT, F, Vp)
    bclsp = _pad2(bcls.reshape(1, -1), 1, Vp)

    out = pl.pallas_call(
        _fc_cls_kernel,
        out_shape=jax.ShapeDtypeStruct((Mp, Vp), jnp.float32),
        grid_spec=pltpu.PrefetchScalarGridSpec(
            num_scalar_prefetch=0,
            grid=(Mp // tm, Vp // tv),
            in_specs=[pl.BlockSpec((tm, H), lambda i, j: (i, 0)),
                      pl.BlockSpec((H, F), lambda i, j: (0, 0)),
                      pl.BlockSpec((1, F), lambda i, j: (0, 0)),
                      pl.BlockSpec((F, tv), lambda i, j: (0, j)),
                      pl.BlockSpec((1, tv), lambda i, j: (0, j))],
            out_specs=pl.BlockSpec((tm, tv), lambda i, j: (i, j)),
            scratch_shapes=[pltpu.VMEM((tm, F), jnp.float32)]),
        compiler_params=pltpu.CompilerParams(
            dimension_semantics=("parallel", "arbitrary"),
            vmem_limit_bytes=VMEM_LIMIT_BYTES),
    )(hp, wfcT, bfc.reshape(1, -1), wclsTp, bclsp)
    return out[:M, :V]


# ----------------------------- LSTM recurrence kernel -------------------------
def _lstm_kernel(gx_ref, whhT_ref, h0_ref, c0_ref, out_ref, hn_ref, cn_ref, *, U, H):
    # hn_ref / cn_ref have a constant block index -> they stay resident in VMEM
    # across grid steps and serve directly as the h / c carry (no extra scratch,
    # single HBM writeback at the end).
    @pl.when(pl.program_id(0) == 0)
    def _():
        hn_ref[...] = h0_ref[...]
        cn_ref[...] = c0_ref[...]

    # Static unrolled loop over the U timesteps of this chunk (static indices ->
    # no dynamic sublane slicing; U <= 32 keeps the unroll small).
    for u in range(U):
        h = hn_ref[...]
        c = cn_ref[...]
        # gx already contains x_t @ (W_ih W_lin)^T + W_ih b_lin + b_ih + b_hh.
        # Recurrence matmul runs on the bf16 MXU path; accumulation is f32.
        gates = gx_ref[:, u, :] + jnp.dot(h.astype(jnp.bfloat16), whhT_ref[...],
                                          preferred_element_type=jnp.float32)
        # Gate nonlinearities kept in f32 (one codepath across v5e/v6e/v7x).
        i_g = jax.nn.sigmoid(gates[:, 0:H])
        f_g = jax.nn.sigmoid(gates[:, H:2 * H])
        g_g = jnp.tanh(gates[:, 2 * H:3 * H])
        o_g = jax.nn.sigmoid(gates[:, 3 * H:4 * H])

        c_new = f_g * c + i_g * g_g
        h_new = o_g * jnp.tanh(c_new)

        cn_ref[...] = c_new
        hn_ref[...] = h_new
        out_ref[:, u, :] = h_new


def _lstm_call(gates_x, whhT_bf16, h0, c0, U, resident):
    N, T, G = gates_x.shape
    H = G // 4
    grid_spec = pltpu.PrefetchScalarGridSpec(
        num_scalar_prefetch=0,
        grid=(T // U,),
        in_specs=[
            pl.BlockSpec((N, U, G), lambda s: (0, s, 0)),            # gx time chunk
            pl.BlockSpec((H, G), lambda s: (0, 0), **resident),      # W_hh^T (bf16, resident)
            pl.BlockSpec((N, H), lambda s: (0, 0), **resident),      # h0
            pl.BlockSpec((N, H), lambda s: (0, 0), **resident),      # c0
        ],
        out_specs=[
            pl.BlockSpec((N, U, H), lambda s: (0, s, 0)),            # out time chunk
            pl.BlockSpec((N, H), lambda s: (0, 0)),                  # h_n (carry)
            pl.BlockSpec((N, H), lambda s: (0, 0)),                  # c_n (carry)
        ],
    )
    out_shape = (jax.ShapeDtypeStruct((N, T, H), jnp.float32),
                 jax.ShapeDtypeStruct((N, H), jnp.float32),
                 jax.ShapeDtypeStruct((N, H), jnp.float32))
    return pl.pallas_call(
        functools.partial(_lstm_kernel, U=U, H=H),
        grid_spec=grid_spec,
        out_shape=out_shape,
        compiler_params=pltpu.CompilerParams(
            dimension_semantics=("arbitrary",),
            vmem_limit_bytes=VMEM_LIMIT_BYTES),
    )(gates_x, whhT_bf16, h0, c0)


def lstm(gates_x, whhT_bf16, h0, c0):
    """gates_x: (N, T, 4H) precomputed input gates (batch-first, no transpose).
    whhT_bf16: (H, 4H) bf16. Returns (out (N, T, H), h_n (N, H), c_n (N, H))."""
    N, T, G = gates_x.shape

    # Pad batch rows to a multiple of 8 sublanes (MXU/VPU utilization); padded
    # rows evolve independently and are sliced off afterwards.
    Np = _round_up(max(N, 1), 8)
    if Np != N:
        gates_x = jnp.pad(gates_x, ((0, Np - N), (0, 0), (0, 0)))
        h0 = jnp.pad(h0, ((0, Np - N), (0, 0)))
        c0 = jnp.pad(c0, ((0, Np - N), (0, 0)))

    # Timesteps per grid iteration: a multiple of 8 (sublane tiling rule) that
    # divides T, else the whole sequence in a single grid step.
    U = T
    for cand in (32, 16, 8):
        if T % cand == 0:
            U = cand
            break

    # TODO(synk): for large batch N, add a leading "parallel" grid axis over
    #             batch blocks to use both v7x TensorCores on the recurrence.
    try:
        out, hn, cn = _lstm_call(gates_x, whhT_bf16, h0, c0, U, _maybe_buffered(1))
    except Exception:
        # pipeline_mode / Buffered not supported by this jax version: fall back.
        out, hn, cn = _lstm_call(gates_x, whhT_bf16, h0, c0, U, {})
    return out[:N], hn[:N], cn[:N]


# ----------------------------- parameters & forward ---------------------------
def init_params(key, vocab_size, emb_dim):
    """PyTorch-layout parameters (mirror of the nn.Module)."""
    ks = jax.random.split(key, 9)
    s = 0.05
    return dict(
        embedding=jax.random.normal(ks[0], (vocab_size, emb_dim), jnp.float32) * s,
        W_lin=jax.random.normal(ks[1], (NUM_HID, emb_dim), jnp.float32) * s,
        b_lin=jax.random.normal(ks[2], (NUM_HID,), jnp.float32) * s,
        W_ih=jax.random.normal(ks[3], (4 * NUM_HID, NUM_HID), jnp.float32) * s,
        W_hh=jax.random.normal(ks[4], (4 * NUM_HID, NUM_HID), jnp.float32) * s,
        b_ih=jax.random.normal(ks[5], (4 * NUM_HID,), jnp.float32) * s,
        b_hh=jax.random.normal(ks[6], (4 * NUM_HID,), jnp.float32) * s,
        W_fc=jax.random.normal(ks[7], (FC_DIM, NUM_HID), jnp.float32) * s,
        b_fc=jnp.zeros((FC_DIM,), jnp.float32),
        W_cls=jax.random.normal(ks[8], (vocab_size, FC_DIM), jnp.float32) * s,
        b_cls=jnp.zeros((vocab_size,), jnp.float32),
    )


def prepare_params(params):
    """One-time preprocessing: fuse Linear(emb,1024) into the LSTM input projection
    (exact — no nonlinearity between them), pre-transpose every weight, and cast
    the recurrence weight to bf16. Done once, NOT per forward call."""
    W_gates = params["W_ih"] @ params["W_lin"]                                  # (4H, emb)
    b_gates = params["W_ih"] @ params["b_lin"] + params["b_ih"] + params["b_hh"]
    return dict(
        embedding=params["embedding"],
        W_gates_T=W_gates.T,                                                    # (emb, 4H)
        b_gates=b_gates,                                                        # (4H,)
        W_hh_T=params["W_hh"].T.astype(jnp.bfloat16),                           # (H, 4H) bf16
        W_fc_T=params["W_fc"].T,                                                # (H, 512)
        b_fc=params["b_fc"],
        W_cls_T=params["W_cls"].T,                                              # (512, V)
        b_cls=params["b_cls"],
    )


def rnnlm_forward(prep, token_ids, hidden=None):
    N, T = token_ids.shape
    # embedding gather (glue, plain JAX)
    emb = jnp.take(prep["embedding"], token_ids.reshape(-1), axis=0)            # (N*T, C)

    # Fused Linear(emb,1024) + input-to-hidden gate projection, tiled matmul.
    gates_x = dense(emb, prep["W_gates_T"], prep["b_gates"])                    # (N*T, 4H)
    gates_x = gates_x.reshape(N, T, 4 * NUM_HID)                                # free view, no transpose

    if hidden is None:
        h0 = jnp.zeros((N, NUM_HID), jnp.float32)
        c0 = jnp.zeros((N, NUM_HID), jnp.float32)
    else:
        h0, c0 = hidden[0][0], hidden[1][0]

    out_nth, h_n, c_n = lstm(gates_x, prep["W_hh_T"], h0, c0)                   # (N, T, H)
    out = out_nth.reshape(N * T, NUM_HID)                                       # free view, no transpose

    # Fused FC(1024->512)+ReLU + classifier (FC tile kept in VMEM scratch).
    logits = fc_classifier(out, prep["W_fc_T"], prep["b_fc"],
                           prep["W_cls_T"], prep["b_cls"])                      # (N*T, vocab)
    return logits, (h_n[None], c_n[None])                                       # hidden: (1, N, H) each


# ----------------------------- pure-JAX reference ------------------------------
def rnnlm_reference(params, token_ids):
    emb = params["embedding"][token_ids]
    N, T, _ = emb.shape
    x = emb.reshape(N * T, -1) @ params["W_lin"].T + params["b_lin"]
    x = x.reshape(N, T, NUM_HID)

    def step(carry, xt):
        h, c = carry
        gates = (xt @ params["W_ih"].T + params["b_ih"]
                 + h @ params["W_hh"].T + params["b_hh"])
        i, f, g, o = jnp.split(gates, 4, axis=-1)
        c = jax.nn.sigmoid(f) * c + jax.nn.sigmoid(i) * jnp.tanh(g)
        h = jax.nn.sigmoid(o) * jnp.tanh(c)
        return (h, c), h

    h0 = jnp.zeros((N, NUM_HID), jnp.float32)
    c0 = jnp.zeros((N, NUM_HID), jnp.float32)
    (hn, cn), outs = jax.lax.scan(step, (h0, c0), x.transpose(1, 0, 2))
    out = outs.transpose(1, 0, 2).reshape(N * T, NUM_HID)
    x = jnp.maximum(out @ params["W_fc"].T + params["b_fc"], 0.0)
    logits = x @ params["W_cls"].T + params["b_cls"]
    return logits, (hn[None], cn[None])


if __name__ == "__main__":
    vocab_size, emb_dim = 128, 64
    N, T = 2, 8

    key = jax.random.PRNGKey(0)
    k_par, k_ids = jax.random.split(key)
    params = init_params(k_par, vocab_size, emb_dim)
    prep = prepare_params(params)
    token_ids = jax.random.randint(k_ids, (N, T), 0, vocab_size, dtype=jnp.int32)

    logits, (h_n, c_n) = rnnlm_forward(prep, token_ids, hidden=None)
    jax.block_until_ready((logits, h_n, c_n))

    ref_logits, (ref_h, ref_c) = rnnlm_reference(params, token_ids)
    assert logits.shape == (N * T, vocab_size)
    assert h_n.shape == (1, N, NUM_HID) and c_n.shape == (1, N, NUM_HID)
    # Tolerances account for the bf16 recurrence matmul (f32 accumulation).
    assert jnp.allclose(logits, ref_logits, atol=2e-2, rtol=2e-2)
    assert jnp.allclose(h_n, ref_h, atol=2e-2, rtol=2e-2)
    assert jnp.allclose(c_n, ref_c, atol=2e-2, rtol=2e-2)

    print("KERNEL_OK")
</pallas_src>

<mosaic_0001>
module attributes {stable_mosaic.version = 11 : i64} {
  func.func @_matmul_bias_kernel(%arg0: i32, %arg1: i32, %arg2: i32, %arg3: memref<16x128xf32, #tpu.memory_space<vmem>>, %arg4: memref<128x512xf32, #tpu.memory_space<vmem>>, %arg5: memref<1x512xf32, #tpu.memory_space<vmem>>, %arg6: memref<16x512xf32, #tpu.memory_space<vmem>>, %arg7: memref<16x512xf32, #tpu.memory_space<vmem>>) attributes {dimension_semantics = [#tpu.dimension_semantics<parallel>, #tpu.dimension_semantics<parallel>, #tpu.dimension_semantics<arbitrary>], iteration_bounds = array<i64: 1, 8, 1>, scalar_prefetch = 0 : i64, scratch_operands = 1 : i64, tpu.core_type = #tpu.core_type<tc>, window_params = [{transform_indices = @transform_0, window_bounds = array<i64: 16, 128>}, {transform_indices = @transform_1, window_bounds = array<i64: 128, 512>}, {transform_indices = @transform_2, window_bounds = array<i64: 1, 512>}, {transform_indices = @transform_3, window_bounds = array<i64: 16, 512>}]} {
    %c0_i32 = arith.constant 0 : i32
    %0 = arith.cmpi eq, %arg2, %c0_i32 : i32
    %1 = arith.extui %0 : i1 to i32
    %c0_i32_0 = arith.constant 0 : i32
    %2 = arith.cmpi ne, %1, %c0_i32_0 : i32
    scf.if %2 {
      %cst_10 = arith.constant 0.000000e+00 : f32
      %12 = vector.broadcast %cst_10 : f32 to vector<16x512xf32>
      %c0_11 = arith.constant 0 : index
      %c0_12 = arith.constant 0 : index
      %13 = vector.load %arg7[%c0_11, %c0_12] : memref<16x512xf32, #tpu.memory_space<vmem>>, vector<16x512xf32>
      tpu.vector_store %arg7[%c0_11, %c0_12], %12 {strides = array<i32>} : memref<16x512xf32, #tpu.memory_space<vmem>>, vector<16x512xf32>,
    } else {
    }
    %c0 = arith.constant 0 : index
    %c0_1 = arith.constant 0 : index
    %3 = vector.load %arg7[%c0, %c0_1] : memref<16x512xf32, #tpu.memory_space<vmem>>, vector<16x512xf32>
    %c0_2 = arith.constant 0 : index
    %c0_3 = arith.constant 0 : index
    %4 = vector.load %arg3[%c0_2, %c0_3] : memref<16x128xf32, #tpu.memory_space<vmem>>, vector<16x128xf32>
    %c0_4 = arith.constant 0 : index
    %c0_5 = arith.constant 0 : index
    %5 = vector.load %arg4[%c0_4, %c0_5] : memref<128x512xf32, #tpu.memory_space<vmem>>, vector<128x512xf32>
    %cst = arith.constant dense<0.000000e+00> : vector<16x512xf32>
    %6 = tpu.matmul %4, %5, %cst {dimension_numbers = #tpu.dot_dimension_numbers<[1], [0], [0], [1], [0, 0, 1, 1], [], []>} : vector<16x128xf32>, vector<128x512xf32>, vector<16x512xf32> -> vector<16x512xf32>
    %7 = arith.addf %3, %6 : vector<16x512xf32>
    %c0_6 = arith.constant 0 : index
    %c0_7 = arith.constant 0 : index
    %8 = vector.load %arg7[%c0_6, %c0_7] : memref<16x512xf32, #tpu.memory_space<vmem>>, vector<16x512xf32>
    tpu.vector_store %arg7[%c0_6, %c0_7], %7 {strides = array<i32>} : memref<16x512xf32, #tpu.memory_space<vmem>>, vector<16x512xf32>,
    %c0_i32_8 = arith.constant 0 : i32
    %9 = arith.cmpi eq, %arg2, %c0_i32_8 : i32
    %10 = arith.extui %9 : i1 to i32
    %c0_i32_9 = arith.constant 0 : i32
    %11 = arith.cmpi ne, %10, %c0_i32_9 : i32
    scf.if %11 {
      %c0_10 = arith.constant 0 : index
      %c0_11 = arith.constant 0 : index
      %12 = vector.load %arg7[%c0_10, %c0_11] : memref<16x512xf32, #tpu.memory_space<vmem>>, vector<16x512xf32>
      %c0_12 = arith.constant 0 : index
      %c0_13 = arith.constant 0 : index
      %13 = vector.load %arg5[%c0_12, %c0_13] : memref<1x512xf32, #tpu.memory_space<vmem>>, vector<1x512xf32>
      %14 = vector.broadcast %13 : vector<1x512xf32> to vector<16x512xf32>
      %15 = arith.addf %12, %14 : vector<16x512xf32>
      %c0_14 = arith.constant 0 : index
      %c0_15 = arith.constant 0 : index
      %16 = vector.load %arg6[%c0_14, %c0_15] : memref<16x512xf32, #tpu.memory_space<vmem>>, vector<16x512xf32>
      tpu.vector_store %arg6[%c0_14, %c0_15], %15 {strides = array<i32>} : memref<16x512xf32, #tpu.memory_space<vmem>>, vector<16x512xf32>,
    } else {
    }
    return
  }
  func.func @transform_0(%arg0: i32, %arg1: i32, %arg2: i32) -> (i32, i32) {
    %c0_i32 = arith.constant 0 : i32
    return %arg0, %arg2 : i32, i32
  }
  func.func @transform_1(%arg0: i32, %arg1: i32, %arg2: i32) -> (i32, i32) {
    %c0_i32 = arith.constant 0 : i32
    return %arg2, %arg1 : i32, i32
  }
  func.func @transform_2(%arg0: i32, %arg1: i32, %arg2: i32) -> (i32, i32) {
    %c0_i32 = arith.constant 0 : i32
    %c0_i32_0 = arith.constant 0 : i32
    return %c0_i32, %arg1 : i32, i32
  }
  func.func @transform_3(%arg0: i32, %arg1: i32, %arg2: i32) -> (i32, i32) {
    %c0_i32 = arith.constant 0 : i32
    return %arg0, %arg1 : i32, i32
  }
}

</mosaic_0001>

<llo_original>
// kernel: tpu_custom_call.1
$region0: #{tpu_custom_call.1}
  #allocation0 [shape = 'u32[]', space=smem, size = 0x4, offset = 0x4, fixed_abs, tag = 'smem constant byte address 0x4 - core index']
  #allocation1 [shape = 'u32[144,128]{1,0:T(1,128)}', space=vmem, size = 0x12000, scoped, tag = 'internal scratch']
  #allocation2 [shape = 'f32[16,512]{1,0:T(8,128)}', space=vmem, size = 0x8000, scoped, tag = 'scratch operand']
  %s0 = inlined_call_operand.hbm [shape: f32[16,128], index: 0, kind: input, shape index: {}]
  %s1 = inlined_call_operand.hbm [shape: f32[128,4096], index: 1, kind: input, shape index: {}]
  %s2 = inlined_call_operand.hbm [shape: f32[1,4096], index: 2, kind: input, shape index: {}]
  %s3 = inlined_call_operand.hbm [shape: f32[16,4096], index: 3, kind: output, shape index: {}]
  %s4 = sld [smem:[#allocation0]]
  $region65: #{tpu_custom_call.1} parent=0
    _
  %s6 = ssub.s32 1, %s4
  %s7 = scalar_select 0, %s6, %s4
  $region1: #{tpu_custom_call.1} parent=0
    #allocation3 [shape = 'u8[8192]{0}', space=vmem, size = 0x2000, scoped, tag = 'input window, operand 0, single buffered']
    #allocation4 [shape = 's32[2]{0}', space=sflag, size = 0x8, scoped, tag = 'scoped memory for tpu_custom_call.1']
    #allocation5 [shape = 's32[2]{0}', space=sflag, size = 0x8, scoped, tag = 'scoped memory for tpu_custom_call.1']
    #allocation6 [shape = 'u8[524288]{0}', space=vmem, size = 0x80000, scoped, tag = 'input window, operand 1']
    #allocation7 [shape = 's32[2]{0}', space=sflag, size = 0x8, scoped, tag = 'scoped memory for tpu_custom_call.1']
    #allocation8 [shape = 'u8[4096]{0}', space=vmem, size = 0x1000, scoped, tag = 'input window, operand 2']
    #allocation9 [shape = 'u8[65536]{0}', space=vmem, size = 0x10000, scoped, tag = 'output window, operand 0']
    %8 = vsyncpa [#allocation4], 0
    %9 = vsyncpa [#allocation7], 0
    %s10 = scalar_lea.sflag [#allocation7], 1
    %11 = vsyncpa %s10, 0
    %12 = vsyncpa [#allocation5], 0
    %s13 = scalar_lea.sflag [#allocation5], 1
    %14 = vsyncpa %s13, 0
    loop: start=0, step=1, limit=10
    $region2: #{tpu_custom_call.1} parent=1 // loop_pre_header
      _
    $region3: #{tpu_custom_call.1} parent=1 // loop_header
      %s16 = sphi 0, %s20
      %p17 = scmp.ge.s32.totalorder %s16, 10
      %s23 = sphi 0, %s42
      %s24 = sphi 0, %s38
      %s25 = sphi 0, %s34
      %s26 = sphi 0, %s23
      %s27 = sphi 0, %s24
      %s28 = sphi 0, %s25
      %s29 = sphi 0, %s26
      %s30 = sphi 0, %s27
      %s31 = sphi 0, %s28
      %s47 = sphi 0, %s49
      %s50 = sphi 0, %s47
      %s51 = sphi 0, %s50
      %s67 = sphi 0, %s51
      %s75 = sphi 0, %s77
      %s78 = sphi 0, %s75
      %s79 = sphi 0, %s78
      %s95 = sphi 0, %s79
      %s101 = sphi 0, %s103
      %s104 = sphi 0, %s101
      %s105 = sphi 0, %s104
      %s121 = sphi 0, %s105
      %s129 = sphi 0, %s131
      %s132 = sphi 0, %s129
      %s133 = sphi 0, %s132
      %s149 = sphi 0, %s133
    $region4: #{tpu_custom_call.1} parent=1 // loop_header_branch
      %19 = sbr.rel (%p17) target = $region8
    $region5: #{tpu_custom_call.1} parent=1 // loop_body
      %s21 = ssub.s32 %s16, 1
      %s22 = ssub.s32 %s16, 2
      %s32 = sadd.s32 1, %s25
      %p33 = scmp.ge.s32.totalorder %s32, 1
      %s34 = scalar_select %p33, 0, %s32
      %s35 = sadd.s32 1, %s24
      %s36 = scalar_select %p33, %s35, %s24
      %p37 = scmp.ge.s32.totalorder %s36, 8
      %s38 = scalar_select %p37, 0, %s36
      %s39 = sadd.s32 1, %s23
      %s40 = scalar_select %p37, %s39, %s23
      %p41 = scmp.ge.s32.totalorder %s40, 1
      %s42 = scalar_select %p41, 0, %s40
      %s43 = ssub.s32 %s23, %s42
      %s44 = ssub.s32 %s25, %s34
      %s45 = sor.u32 %s43, %s44
      %p46 = scmp.eq.s32.totalorder %s45, 0
      %s48 = sadd.s32 %s47, 1
      %s49 = scalar_select %p46, %s47, %s48
      %p52 = pneg %p46
      %p53 = scmp.eq.s32.totalorder %s16, 7
      %p54 = por %p52, %p53
      %p55 = scmp.ne.s32.totalorder %s47, %s50
      %p56 = scmp.eq.s32.totalorder %s16, 0
      %p57 = por %p55, %p56
      %p58 = scmp.ne.s32.totalorder %s47, %s50
      %p59 = scmp.eq.s32.totalorder %s21, 7
      %p60 = por %p58, %p59
      %p61 = scmp.ne.s32.totalorder %s50, %s51
      %p62 = scmp.eq.s32.totalorder %s21, 0
      %p63 = por %p61, %p62
      %p64 = scmp.ne.s32.totalorder %s50, %s51
      %p65 = scmp.eq.s32.totalorder %s22, 7
      %p66 = por %p64, %p65
      %p68 = scmp.ne.s32.totalorder %s51, %s67
      %p69 = scmp.eq.s32.totalorder %s22, 0
      %p70 = por %p68, %p69
      %s71 = ssub.s32 %s25, %s34
      %s72 = ssub.s32 %s24, %s38
      %s73 = sor.u32 %s71, %s72
      %p74 = scmp.eq.s32.totalorder %s73, 0
      %s76 = sadd.s32 %s75, 1
      %s77 = scalar_select %p74, %s75, %s76
      %p80 = pneg %p74
      %p81 = scmp.eq.s32.totalorder %s16, 7
      %p82 = por %p80, %p81
      %p83 = scmp.ne.s32.totalorder %s75, %s78
      %p84 = scmp.eq.s32.totalorder %s16, 0
      %p85 = por %p83, %p84
      %p86 = scmp.ne.s32.totalorder %s75, %s78
      %p87 = scmp.eq.s32.totalorder %s21, 7
      %p88 = por %p86, %p87
      %p89 = scmp.ne.s32.totalorder %s78, %s79
      %p90 = scmp.eq.s32.totalorder %s21, 0
      %p91 = por %p89, %p90
      %p92 = scmp.ne.s32.totalorder %s78, %s79
      %p93 = scmp.eq.s32.totalorder %s22, 7
      %p94 = por %p92, %p93
      %p96 = scmp.ne.s32.totalorder %s79, %s95
      %p97 = scmp.eq.s32.totalorder %s22, 0
      %p98 = por %p96, %p97
      %s99 = ssub.s32 %s24, %s38
      %p100 = scmp.eq.s32.totalorder %s99, 0
      %s102 = sadd.s32 %s101, 1
      %s103 = scalar_select %p100, %s101, %s102
      %p106 = pneg %p100
      %p107 = scmp.eq.s32.totalorder %s16, 7
      %p108 = por %p106, %p107
      %p109 = scmp.ne.s32.totalorder %s101, %s104
      %p110 = scmp.eq.s32.totalorder %s16, 0
      %p111 = por %p109, %p110
      %p112 = scmp.ne.s32.totalorder %s101, %s104
      %p113 = scmp.eq.s32.totalorder %s21, 7
      %p114 = por %p112, %p113
      %p115 = scmp.ne.s32.totalorder %s104, %s105
      %p116 = scmp.eq.s32.totalorder %s21, 0
      %p117 = por %p115, %p116
      %p118 = scmp.ne.s32.totalorder %s104, %s105
      %p119 = scmp.eq.s32.totalorder %s22, 7
      %p120 = por %p118, %p119
      %p122 = scmp.ne.s32.totalorder %s105, %s121
      %p123 = scmp.eq.s32.totalorder %s22, 0
      %p124 = por %p122, %p123
      %s125 = ssub.s32 %s23, %s42
      %s126 = ssub.s32 %s24, %s38
      %s127 = sor.u32 %s125, %s126
      %p128 = scmp.eq.s32.totalorder %s127, 0
      %s130 = sadd.s32 %s129, 1
      %s131 = scalar_select %p128, %s129, %s130
      %p134 = pneg %p128
      %p135 = scmp.eq.s32.totalorder %s16, 7
      %p136 = por %p134, %p135
      %p137 = scmp.ne.s32.totalorder %s129, %s132
      %p138 = scmp.eq.s32.totalorder %s16, 0
      %p139 = por %p137, %p138
      %p140 = scmp.ne.s32.totalorder %s129, %s132
      %p141 = scmp.eq.s32.totalorder %s21, 7
      %p142 = por %p140, %p141
      %p143 = scmp.ne.s32.totalorder %s132, %s133
      %p144 = scmp.eq.s32.totalorder %s21, 0
      %p145 = por %p143, %p144
      %p146 = scmp.ne.s32.totalorder %s132, %s133
      %p147 = scmp.eq.s32.totalorder %s22, 7
      %p148 = por %p146, %p147
      %p150 = scmp.ne.s32.totalorder %s133, %s149
      %p151 = scmp.eq.s32.totalorder %s22, 0
      %p152 = por %p150, %p151
      %p153 = scmp.le.s32.totalorder 1, %s16
      %p154 = scmp.lt.s32.totalorder %s16, 9
      %p155 = pnand %p153, %p154
      %p156 = pneg %p155
      // Predicated region
      $region9: #{tpu_custom_call.1} parent=5 // pred_check
        _
      $region10: #{tpu_custom_call.1} parent=5 // pred_check_branch
        %158 = sbr.rel (%p155) target = $region12
      $region11: #{tpu_custom_call.1} parent=5 // pred_region
        %s159 = ssub.s32 %s16, 1
        // Predicated region
        $region13: #{tpu_custom_call.1} parent=11 // pred_check
          %p160 = pneg %p63
        $region14: #{tpu_custom_call.1} parent=11 // pred_check_branch
          %162 = sbr.rel (%p160) target = $region16
        $region15: #{tpu_custom_call.1} parent=11 // pred_region
          %s163 = smul.u32 2, %s26
          %s165 = ssub.s32 256, 256
          %166 = vsyncadd [#allocation4], %s165
          %s167 = sadd.s32 %s28, %s163
          %s168 = smul.addr %s167, 128
          %s169 = scalar_lea.hbm %s0, %s168
          %s170 = sshll.u32 [#allocation3], 4
          %s171 = int_to_ptr.vmem [resolvable:$true] %s170
          %176 = dma.hbm_to_vmem [thread:$0]  %s169, 256, %s171, [#allocation4], 128, 128, 8
        $region16: #{tpu_custom_call.1} parent=11 // pred_fallthru
          _
      $region12: #{tpu_custom_call.1} parent=5 // pred_fallthru
        _
      %p177 = scmp.lt.s32.totalorder %s16, 8
      // Predicated region
      $region17: #{tpu_custom_call.1} parent=5 // pred_check
        %p178 = pneg %p177
      $region18: #{tpu_custom_call.1} parent=5 // pred_check_branch
        %180 = sbr.rel (%p178) target = $region20
      $region19: #{tpu_custom_call.1} parent=5 // pred_region
        // Predicated region
        $region21: #{tpu_custom_call.1} parent=19 // pred_check
          %p181 = pneg %p85
        $region22: #{tpu_custom_call.1} parent=19 // pred_check_branch
          %183 = sbr.rel (%p181) target = $region24
        $region23: #{tpu_custom_call.1} parent=19 // pred_region
          %s184 = sand.u32 %s16, 1
          %s185 = scalar_lea.sflag [#allocation7], %s184
          %s186 = sand.u32 %s75, 1
          %s187 = smul.addr %s186, 512
          %s188 = scalar_lea.vmem [#allocation6], %s187
          %s189 = smul.u32 16, %s25
          %s190 = smul.u32 4, %s24
          %s192 = ssub.s32 8192, 8192
          %193 = vsyncadd %s185, %s192
          %s194 = smul.addr %s189, 32
          %s195 = sadd.s32 %s190, %s194
          %s196 = smul.addr %s195, 128
          %s197 = scalar_lea.hbm %s1, %s196
          %s198 = sshll.u32 %s188, 4
          %s199 = int_to_ptr.vmem [resolvable:$true] %s198
          %204 = dma.hbm_to_vmem [thread:$0]  %s197, 8192, %s199, %s185, 4096, 512, 32
        $region24: #{tpu_custom_call.1} parent=19 // pred_fallthru
          _
        // Predicated region
        $region25: #{tpu_custom_call.1} parent=19 // pred_check
          %p205 = pneg %p111
        $region26: #{tpu_custom_call.1} parent=19 // pred_check_branch
          %207 = sbr.rel (%p205) target = $region28
        $region27: #{tpu_custom_call.1} parent=19 // pred_region
          %s208 = sand.u32 %s16, 1
          %s209 = scalar_lea.sflag [#allocation7], %s208
          %s210 = sand.u32 %s101, 1
          %s211 = smul.addr %s210, 4
          %s212 = scalar_lea.vmem [#allocation8], %s211
          %s213 = smul.u32 4, %s24
          %s215 = ssub.s32 64, 64
          %216 = vsyncadd %s209, %s215
          %s217 = smul.addr %s213, 16
          %s218 = scalar_lea.hbm %s2, %s217
          %s220 = sshll.u32 %s212, 4
          %s221 = int_to_ptr.vmem [resolvable:$true] %s220
          %223 = dma.hbm_to_vmem [thread:$0]  %s218, 64, %s221, %s209
        $region28: #{tpu_custom_call.1} parent=19 // pred_fallthru
          _
      $region20: #{tpu_custom_call.1} parent=5 // pred_fallthru
        _
      %p224 = scmp.le.s32.totalorder 1, %s16
      %p225 = scmp.lt.s32.totalorder %s16, 9
      %p226 = pnand %p224, %p225
      %p227 = pneg %p226
      // Predicated region
      $region29: #{tpu_custom_call.1} parent=5 // pred_check
        _
      $region30: #{tpu_custom_call.1} parent=5 // pred_check_branch
        %229 = sbr.rel (%p226) target = $region32
      $region31: #{tpu_custom_call.1} parent=5 // pred_region
        %s230 = ssub.s32 %s16, 1
        // Predicated region
        $region33: #{tpu_custom_call.1} parent=31 // pred_check
          %p231 = pneg %p63
        $region34: #{tpu_custom_call.1} parent=31 // pred_check_branch
          %233 = sbr.rel (%p231) target = $region36
        $region35: #{tpu_custom_call.1} parent=31 // pred_region
          %234 = dma.done [#allocation4], 256
        $region36: #{tpu_custom_call.1} parent=31 // pred_fallthru
          _
        %s235 = sand.u32 %s21, 1
        %s236 = scalar_lea.sflag [#allocation7], %s235
        %s237 = sand.u32 %s78, 1
        %s238 = smul.addr %s237, 512
        %s239 = scalar_lea.vmem [#allocation6], %s238
        // Predicated region
        $region37: #{tpu_custom_call.1} parent=31 // pred_check
          %p240 = pneg %p91
        $region38: #{tpu_custom_call.1} parent=31 // pred_check_branch
          %242 = sbr.rel (%p240) target = $region40
        $region39: #{tpu_custom_call.1} parent=31 // pred_region
          %243 = dma.done %s236, 8192
        $region40: #{tpu_custom_call.1} parent=31 // pred_fallthru
          _
        %s244 = sand.u32 %s21, 1
        %s245 = scalar_lea.sflag [#allocation7], %s244
        %s246 = sand.u32 %s104, 1
        %s247 = smul.addr %s246, 4
        %s248 = scalar_lea.vmem [#allocation8], %s247
        // Predicated region
        $region41: #{tpu_custom_call.1} parent=31 // pred_check
          %p249 = pneg %p117
        $region42: #{tpu_custom_call.1} parent=31 // pred_check_branch
          %251 = sbr.rel (%p249) target = $region44
        $region43: #{tpu_custom_call.1} parent=31 // pred_region
          %252 = dma.done %s245, 64
        $region44: #{tpu_custom_call.1} parent=31 // pred_fallthru
          _
        %p253 = pneg %p63
        %p254 = pneg %p60
        %s255 = sand.u32 %s21, 1
        %s256 = scalar_lea.sflag [#allocation7], %s255
        %s257 = sand.u32 %s78, 1
        %s258 = smul.addr %s257, 512
        %s259 = scalar_lea.vmem [#allocation6], %s258
        %p260 = pneg %p91
        %p261 = pneg %p88
        %s262 = sand.u32 %s21, 1
        %s263 = scalar_lea.sflag [#allocation7], %s262
        %s264 = sand.u32 %s104, 1
        %s265 = smul.addr %s264, 4
        %s266 = scalar_lea.vmem [#allocation8], %s265
        %p267 = pneg %p117
        %p268 = pneg %p114
        %p269 = pneg %p145
        %p270 = pneg %p142
        %s271 = sand.u32 %s132, 1
        %s272 = scalar_lea.sflag [#allocation5], %s271
        %s273 = sand.u32 %s132, 1
        %s274 = smul.addr %s273, 64
        %s275 = scalar_lea.vmem [#allocation9], %s274
        %s276 = smul.u32 2, %s26
        %s277 = smul.u32 16, %s28
        %s278 = smul.u32 4, %s27
        %s279 = smul.u32 4, %s27
        %s280 = smul.u32 2, %s26
        %s281 = smul.u32 4, %s27
        %p282 = scmp.eq.s32.totalorder %s28, 0
        // Predicated region
        $region45: #{tpu_custom_call.1} parent=31 // pred_check
          %p283 = pneg %p282
        $region46: #{tpu_custom_call.1} parent=31 // pred_check_branch
          %285 = sbr.rel (%p283) target = $region48
        $region47: #{tpu_custom_call.1} parent=31 // pred_region
          %286 = vst [vmem:[#allocation2] sm:$0xff] 0.0
          %287 = vst [vmem:[#allocation2 + $0x8] sm:$0xff] 0.0
          %288 = vst [vmem:[#allocation2 + $0x10] sm:$0xff] 0.0
          %289 = vst [vmem:[#allocation2 + $0x18] sm:$0xff] 0.0
          %290 = vst [vmem:[#allocation2 + $0x20] sm:$0xff] 0.0
          %291 = vst [vmem:[#allocation2 + $0x28] sm:$0xff] 0.0
          %292 = vst [vmem:[#allocation2 + $0x30] sm:$0xff] 0.0
          %293 = vst [vmem:[#allocation2 + $0x38] sm:$0xff] 0.0
        $region48: #{tpu_custom_call.1} parent=31 // pred_fallthru
          _
        %v294 = vld [vmem:[#allocation2] sm:$0xff]
        %v295 = vld [vmem:[#allocation2 + $0x8] sm:$0xff]
        %v296 = vld [vmem:[#allocation2 + $0x10] sm:$0xff]
        %v297 = vld [vmem:[#allocation2 + $0x18] sm:$0xff]
        %v298 = vld [vmem:[#allocation2 + $0x20] sm:$0xff]
        %v299 = vld [vmem:[#allocation2 + $0x28] sm:$0xff]
        %v300 = vld [vmem:[#allocation2 + $0x30] sm:$0xff]
        %v301 = vld [vmem:[#allocation2 + $0x38] sm:$0xff]
        %v302 = vld [vmem:[#allocation3] sm:$0xff]
        %v303 = vld [vmem:[#allocation3 + $0x8] sm:$0xff]
        %v304 = vld [vmem:[%s239] sm:$0xff]
        %v305 = vld [vmem:[%s239 + $0x8] sm:$0xff]
        %v306 = vld [vmem:[%s239 + $0x10] sm:$0xff]
        %v307 = vld [vmem:[%s239 + $0x18] sm:$0xff]
        %v308 = vld [vmem:[%s239 + $0x20] sm:$0xff]
        %v309 = vld [vmem:[%s239 + $0x28] sm:$0xff]
        %v310 = vld [vmem:[%s239 + $0x30] sm:$0xff]
        %v311 = vld [vmem:[%s239 + $0x38] sm:$0xff]
        %v312 = vld [vmem:[%s239 + $0x40] sm:$0xff]
        %v313 = vld [vmem:[%s239 + $0x48] sm:$0xff]
        %v314 = vld [vmem:[%s239 + $0x50] sm:$0xff]
        %v315 = vld [vmem:[%s239 + $0x58] sm:$0xff]
        %v316 = vld [vmem:[%s239 + $0x60] sm:$0xff]
        %v317 = vld [vmem:[%s239 + $0x68] sm:$0xff]
        %v318 = vld [vmem:[%s239 + $0x70] sm:$0xff]
        %v319 = vld [vmem:[%s239 + $0x78] sm:$0xff]
        %v320 = vld [vmem:[%s239 + $0x80] sm:$0xff]
        %v321 = vld [vmem:[%s239 + $0x88] sm:$0xff]
        %v322 = vld [vmem:[%s239 + $0x90] sm:$0xff]
        %v323 = vld [vmem:[%s239 + $0x98] sm:$0xff]
        %v324 = vld [vmem:[%s239 + $0xa0] sm:$0xff]
        %v325 = vld [vmem:[%s239 + $0xa8] sm:$0xff]
        %v326 = vld [vmem:[%s239 + $0xb0] sm:$0xff]
        %v327 = vld [vmem:[%s239 + $0xb8] sm:$0xff]
        %v328 = vld [vmem:[%s239 + $0xc0] sm:$0xff]
        %v329 = vld [vmem:[%s239 + $0xc8] sm:$0xff]
        %v330 = vld [vmem:[%s239 + $0xd0] sm:$0xff]
        %v331 = vld [vmem:[%s239 + $0xd8] sm:$0xff]
        %v332 = vld [vmem:[%s239 + $0xe0] sm:$0xff]
        %v333 = vld [vmem:[%s239 + $0xe8] sm:$0xff]
        %v334 = vld [vmem:[%s239 + $0xf0] sm:$0xff]
        %v335 = vld [vmem:[%s239 + $0xf8] sm:$0xff]
        %v336 = vld [vmem:[%s239 + $0x100] sm:$0xff]
        %v337 = vld [vmem:[%s239 + $0x108] sm:$0xff]
        %v338 = vld [vmem:[%s239 + $0x110] sm:$0xff]
        %v339 = vld [vmem:[%s239 + $0x118] sm:$0xff]
        %v340 = vld [vmem:[%s239 + $0x120] sm:$0xff]
        %v341 = vld [vmem:[%s239 + $0x128] sm:$0xff]
        %v342 = vld [vmem:[%s239 + $0x130] sm:$0xff]
        %v343 = vld [vmem:[%s239 + $0x138] sm:$0xff]
        %v344 = vld [vmem:[%s239 + $0x140] sm:$0xff]
        %v345 = vld [vmem:[%s239 + $0x148] sm:$0xff]
        %v346 = vld [vmem:[%s239 + $0x150] sm:$0xff]
        %v347 = vld [vmem:[%s239 + $0x158] sm:$0xff]
        %v348 = vld [vmem:[%s239 + $0x160] sm:$0xff]
        %v349 = vld [vmem:[%s239 + $0x168] sm:$0xff]
        %v350 = vld [vmem:[%s239 + $0x170] sm:$0xff]
        %v351 = vld [vmem:[%s239 + $0x178] sm:$0xff]
        %v352 = vld [vmem:[%s239 + $0x180] sm:$0xff]
        %v353 = vld [vmem:[%s239 + $0x188] sm:$0xff]
        %v354 = vld [vmem:[%s239 + $0x190] sm:$0xff]
        %v355 = vld [vmem:[%s239 + $0x198] sm:$0xff]
        %v356 = vld [vmem:[%s239 + $0x1a0] sm:$0xff]
        %v357 = vld [vmem:[%s239 + $0x1a8] sm:$0xff]
        %v358 = vld [vmem:[%s239 + $0x1b0] sm:$0xff]
        %v359 = vld [vmem:[%s239 + $0x1b8] sm:$0xff]
        %v360 = vld [vmem:[%s239 + $0x1c0] sm:$0xff]
        %v361 = vld [vmem:[%s239 + $0x1c8] sm:$0xff]
        %v362 = vld [vmem:[%s239 + $0x1d0] sm:$0xff]
        %v363 = vld [vmem:[%s239 + $0x1d8] sm:$0xff]
        %v364 = vld [vmem:[%s239 + $0x1e0] sm:$0xff]
        %v365 = vld [vmem:[%s239 + $0x1e8] sm:$0xff]
        %v366 = vld [vmem:[%s239 + $0x1f0] sm:$0xff]
        %v367 = vld [vmem:[%s239 + $0x1f8] sm:$0xff]
        %368 = vmatprep.subr.mxu0 %v305
        %369 = vmatpush1.msra.mxu0 %v304
        %370 = vmatprep.subr.mxu0 %v309
        %371 = vmatpush1.msra.mxu0 %v308
        %372 = vmatprep.subr.mxu0 %v313
        %373 = vmatpush1.msra.mxu0 %v312
        %374 = vmatprep.subr.mxu0 %v317
        %375 = vmatpush1.msra.mxu0 %v316
        %376 = vmatprep.subr.mxu0 %v321
        %377 = vmatpush1.msra.mxu0 %v320
        %378 = vmatprep.subr.mxu0 %v325
        %379 = vmatpush1.msra.mxu0 %v324
        %380 = vmatprep.subr.mxu0 %v329
        %381 = vmatpush1.msra.mxu0 %v328
        %382 = vmatprep.subr.mxu0 %v333
        %383 = vmatpush1.msra.mxu0 %v332
        %384 = vmatprep.subr.mxu0 %v337
        %385 = vmatpush1.msra.mxu0 %v336
        %386 = vmatprep.subr.mxu0 %v341
        %387 = vmatpush1.msra.mxu0 %v340
        %388 = vmatprep.subr.mxu0 %v345
        %389 = vmatpush1.msra.mxu0 %v344
        %390 = vmatprep.subr.mxu0 %v349
        %391 = vmatpush1.msra.mxu0 %v348
        %392 = vmatprep.subr.mxu0 %v353
        %393 = vmatpush1.msra.mxu0 %v352
        %394 = vmatprep.subr.mxu0 %v357
        %395 = vmatpush1.msra.mxu0 %v356
        %396 = vmatprep.subr.mxu0 %v361
        %397 = vmatpush1.msra.mxu0 %v360
        %398 = vmatprep.subr.mxu0 %v365
        %399 = vmatpush1.msra.mxu0 %v364
        %400 = vmatprep.subr.mxu0 0.0
        %401 = vmatpush1.msra.mxu0 0.0
        %402 = vmatprep.subr.mxu0 0.0
        %403 = vmatpush1.msra.mxu0 0.0
        %404 = vmatprep.subr.mxu0 0.0
        %405 = vmatpush1.msra.mxu0 0.0
        %406 = vmatprep.subr.mxu0 0.0
        %407 = vmatpush1.msra.mxu0 0.0
        %408 = vmatprep.subr.mxu0 0.0
        %409 = vmatpush1.msra.mxu0 0.0
        %410 = vmatprep.subr.mxu0 0.0
        %411 = vmatpush1.msra.mxu0 0.0
        %412 = vmatprep.subr.mxu0 0.0
        %413 = vmatpush1.msra.mxu0 0.0
        %414 = vmatprep.subr.mxu0 0.0
        %415 = vmatpush1.msra.mxu0 0.0
        %416 = vmatprep.subr.mxu0 0.0
        %417 = vmatpush1.msra.mxu0 0.0
        %418 = vmatprep.subr.mxu0 0.0
        %419 = vmatpush1.msra.mxu0 0.0
        %420 = vmatprep.subr.mxu0 0.0
        %421 = vmatpush1.msra.mxu0 0.0
        %422 = vmatprep.subr.mxu0 0.0
        %423 = vmatpush1.msra.mxu0 0.0
        %424 = vmatprep.subr.mxu0 0.0
        %425 = vmatpush1.msra.mxu0 0.0
        %426 = vmatprep.subr.mxu0 0.0
        %427 = vmatpush1.msra.mxu0 0.0
        %428 = vmatprep.subr.mxu0 0.0
        %429 = vmatpush1.msra.mxu0 0.0
        %430 = vmatprep.subr.mxu0 0.0
        %431 = vmatpush1.msra.mxu0 0.0
        %432 = vmatprep.mubr.f32.mxu0 0.0
        %433 = vmatmul.mubr.f32.gmra.mrb[0].mxu0 %v302
        %v434 = vpop.f32.mrb[0].mxu0
        %v435 = vadd.f32 0.0, %v434
        %v436 = vpop.f32.mrb[0].mxu0
        %v437 = vadd.f32 0.0, %v436
        %438 = vmatprep.mubr.f32.mxu0 0.0
        %439 = vmatmul.mubr.f32.gmra.mrb[0].mxu0 %v303
        %v440 = vpop.f32.mrb[0].mxu0
        %v441 = vadd.f32 0.0, %v440
        %v442 = vpop.f32.mrb[0].mxu0
        %v443 = vadd.f32 0.0, %v442
        %444 = vdwg.mxu0
        %445 = vmatprep.subr.mxu0 %v307
        %446 = vmatpush1.msra.mxu0 %v306
        %447 = vmatprep.subr.mxu0 %v311
        %448 = vmatpush1.msra.mxu0 %v310
        %449 = vmatprep.subr.mxu0 %v315
        %450 = vmatpush1.msra.mxu0 %v314
        %451 = vmatprep.subr.mxu0 %v319
        %452 = vmatpush1.msra.mxu0 %v318
        %453 = vmatprep.subr.mxu0 %v323
        %454 = vmatpush1.msra.mxu0 %v322
        %455 = vmatprep.subr.mxu0 %v327
        %456 = vmatpush1.msra.mxu0 %v326
        %457 = vmatprep.subr.mxu0 %v331
        %458 = vmatpush1.msra.mxu0 %v330
        %459 = vmatprep.subr.mxu0 %v335
        %460 = vmatpush1.msra.mxu0 %v334
        %461 = vmatprep.subr.mxu0 %v339
        %462 = vmatpush1.msra.mxu0 %v338
        %463 = vmatprep.subr.mxu0 %v343
        %464 = vmatpush1.msra.mxu0 %v342
        %465 = vmatprep.subr.mxu0 %v347
        %466 = vmatpush1.msra.mxu0 %v346
        %467 = vmatprep.subr.mxu0 %v351
        %468 = vmatpush1.msra.mxu0 %v350
        %469 = vmatprep.subr.mxu0 %v355
        %470 = vmatpush1.msra.mxu0 %v354
        %471 = vmatprep.subr.mxu0 %v359
        %472 = vmatpush1.msra.mxu0 %v358
        %473 = vmatprep.subr.mxu0 %v363
        %474 = vmatpush1.msra.mxu0 %v362
        %475 = vmatprep.subr.mxu0 %v367
        %476 = vmatpush1.msra.mxu0 %v366
        %477 = vmatprep.subr.mxu0 0.0
        %478 = vmatpush1.msra.mxu0 0.0
        %479 = vmatprep.subr.mxu0 0.0
        %480 = vmatpush1.msra.mxu0 0.0
        %481 = vmatprep.subr.mxu0 0.0
        %482 = vmatpush1.msra.mxu0 0.0
        %483 = vmatprep.subr.mxu0 0.0
        %484 = vmatpush1.msra.mxu0 0.0
        %485 = vmatprep.subr.mxu0 0.0
        %486 = vmatpush1.msra.mxu0 0.0
        %487 = vmatprep.subr.mxu0 0.0
        %488 = vmatpush1.msra.mxu0 0.0
        %489 = vmatprep.subr.mxu0 0.0
        %490 = vmatpush1.msra.mxu0 0.0
        %491 = vmatprep.subr.mxu0 0.0
        %492 = vmatpush1.msra.mxu0 0.0
        %493 = vmatprep.subr.mxu0 0.0
        %494 = vmatpush1.msra.mxu0 0.0
        %495 = vmatprep.subr.mxu0 0.0
        %496 = vmatpush1.msra.mxu0 0.0
        %497 = vmatprep.subr.mxu0 0.0
        %498 = vmatpush1.msra.mxu0 0.0
        %499 = vmatprep.subr.mxu0 0.0
        %500 = vmatpush1.msra.mxu0 0.0
        %501 = vmatprep.subr.mxu0 0.0
        %502 = vmatpush1.msra.mxu0 0.0
        %503 = vmatprep.subr.mxu0 0.0
        %504 = vmatpush1.msra.mxu0 0.0
        %505 = vmatprep.subr.mxu0 0.0
        %506 = vmatpush1.msra.mxu0 0.0
        %507 = vmatprep.subr.mxu0 0.0
        %508 = vmatpush1.msra.mxu0 0.0
        %509 = vmatprep.mubr.f32.mxu0 0.0
        %510 = vmatmul.mubr.f32.gmra.mrb[0].mxu0 %v302
        %v511 = vpop.f32.mrb[0].mxu0
        %v512 = vadd.f32 0.0, %v511
        %v513 = vpop.f32.mrb[0].mxu0
        %v514 = vadd.f32 0.0, %v513
        %515 = vmatprep.mubr.f32.mxu0 0.0
        %516 = vmatmul.mubr.f32.gmra.mrb[0].mxu0 %v303
        %v517 = vpop.f32.mrb[0].mxu0
        %v518 = vadd.f32 0.0, %v517
        %v519 = vpop.f32.mrb[0].mxu0
        %v520 = vadd.f32 0.0, %v519
        %521 = vdwg.mxu0
        %v522 = vadd.f32 %v294, %v435
        %v523 = vadd.f32 %v295, %v437
        %v524 = vadd.f32 %v296, %v512
        %v525 = vadd.f32 %v297, %v514
        %v526 = vadd.f32 %v298, %v441
        %v527 = vadd.f32 %v299, %v443
        %v528 = vadd.f32 %v300, %v518
        %v529 = vadd.f32 %v301, %v520
        %530 = vst [vmem:[#allocation2] sm:$0xff] %v522
        %531 = vst [vmem:[#allocation2 + $0x8] sm:$0xff] %v523
        %532 = vst [vmem:[#allocation2 + $0x10] sm:$0xff] %v524
        %533 = vst [vmem:[#allocation2 + $0x18] sm:$0xff] %v525
        %534 = vst [vmem:[#allocation2 + $0x20] sm:$0xff] %v526
        %535 = vst [vmem:[#allocation2 + $0x28] sm:$0xff] %v527
        %536 = vst [vmem:[#allocation2 + $0x30] sm:$0xff] %v528
        %537 = vst [vmem:[#allocation2 + $0x38] sm:$0xff] %v529
        // Predicated region
        $region49: #{tpu_custom_call.1} parent=31 // pred_check
          %p538 = pneg %p282
        $region50: #{tpu_custom_call.1} parent=31 // pred_check_branch
          %540 = sbr.rel (%p538) target = $region52
        $region51: #{tpu_custom_call.1} parent=31 // pred_region
          %v541 = vld [vmem:[#allocation2] sm:$0xff]
          %v542 = vld [vmem:[#allocation2 + $0x8] sm:$0xff]
          %v543 = vld [vmem:[#allocation2 + $0x10] sm:$0xff]
          %v544 = vld [vmem:[#allocation2 + $0x18] sm:$0xff]
          %v545 = vld [vmem:[#allocation2 + $0x20] sm:$0xff]
          %v546 = vld [vmem:[#allocation2 + $0x28] sm:$0xff]
          %v547 = vld [vmem:[#allocation2 + $0x30] sm:$0xff]
          %v548 = vld [vmem:[#allocation2 + $0x38] sm:$0xff]
          %v549 = vld [vmem:[%s248] sm:$0xf]
          %v551 = vlaneseq
          %v552 = vshrl.u32 %v551, 7
          %v553 = vsub.s32 0, %v552
          %v554 = vrot.slane %v549, %v553
          %v555 = vlaneseq
          %v556 = vshrl.u32 %v555, 7
          %v557 = vsub.s32 1, %v556
          %v558 = vrot.slane %v549, %v557
          %v559 = vlaneseq
          %v560 = vshrl.u32 %v559, 7
          %v561 = vsub.s32 2, %v560
          %v562 = vrot.slane %v549, %v561
          %v563 = vlaneseq
          %v564 = vshrl.u32 %v563, 7
          %v565 = vsub.s32 3, %v564
          %v566 = vrot.slane %v549, %v565
          %v571 = vadd.f32 %v541, %v554
          %v572 = vadd.f32 %v542, %v558
          %v573 = vadd.f32 %v543, %v562
          %v574 = vadd.f32 %v544, %v566
          %v575 = vadd.f32 %v545, %v554
          %v576 = vadd.f32 %v546, %v558
          %v577 = vadd.f32 %v547, %v562
          %v578 = vadd.f32 %v548, %v566
          %579 = vst [vmem:[%s275] sm:$0xff] %v571
          %580 = vst [vmem:[%s275 + $0x8] sm:$0xff] %v572
          %581 = vst [vmem:[%s275 + $0x10] sm:$0xff] %v573
          %582 = vst [vmem:[%s275 + $0x18] sm:$0xff] %v574
          %583 = vst [vmem:[%s275 + $0x20] sm:$0xff] %v575
          %584 = vst [vmem:[%s275 + $0x28] sm:$0xff] %v576
          %585 = vst [vmem:[%s275 + $0x30] sm:$0xff] %v577
          %586 = vst [vmem:[%s275 + $0x38] sm:$0xff] %v578
        $region52: #{tpu_custom_call.1} parent=31 // pred_fallthru
          _
        %s587 = sand.u32 %s132, 1
        %s588 = scalar_lea.sflag [#allocation5], %s587
        %s589 = sand.u32 %s132, 1
        %s590 = smul.addr %s589, 64
        %s591 = scalar_lea.vmem [#allocation9], %s590
        // Predicated region
        $region53: #{tpu_custom_call.1} parent=31 // pred_check
          %p592 = pneg %p142
        $region54: #{tpu_custom_call.1} parent=31 // pred_check_branch
          %594 = sbr.rel (%p592) target = $region56
        $region55: #{tpu_custom_call.1} parent=31 // pred_region
          %s595 = smul.u32 2, %s26
          %s596 = smul.u32 4, %s27
          %s598 = ssub.s32 1024, 1024
          %599 = vsyncadd %s588, %s598
          %s600 = smul.addr %s595, 32
          %s601 = sadd.s32 %s596, %s600
          %s602 = smul.addr %s601, 128
          %s603 = scalar_lea.hbm %s3, %s602
          %s604 = sshll.u32 %s591, 4
          %s605 = int_to_ptr.vmem [resolvable:$true] %s604
          %610 = dma.vmem_to_hbm [thread:$0]  %s605, 1024, %s603, %s588, 512, 4096, 32
        $region56: #{tpu_custom_call.1} parent=31 // pred_fallthru
          _
      $region32: #{tpu_custom_call.1} parent=5 // pred_fallthru
        _
      %p611 = scmp.le.s32.totalorder 2, %s16
      // Predicated region
      $region57: #{tpu_custom_call.1} parent=5 // pred_check
        %p612 = pneg %p611
      $region58: #{tpu_custom_call.1} parent=5 // pred_check_branch
        %614 = sbr.rel (%p612) target = $region60
      $region59: #{tpu_custom_call.1} parent=5 // pred_region
        %s615 = ssub.s32 %s16, 2
        // Predicated region
        $region61: #{tpu_custom_call.1} parent=59 // pred_check
          %p616 = pneg %p148
        $region62: #{tpu_custom_call.1} parent=59 // pred_check_branch
          %618 = sbr.rel (%p616) target = $region64
        $region63: #{tpu_custom_call.1} parent=59 // pred_region
          %s619 = sand.u32 %s133, 1
          %s620 = scalar_lea.sflag [#allocation5], %s619
          %s621 = sand.u32 %s133, 1
          %s622 = smul.addr %s621, 64
          %s623 = scalar_lea.vmem [#allocation9], %s622
          %624 = dma.done %s620, 1024
        $region64: #{tpu_custom_call.1} parent=59 // pred_fallthru
          _
      $region60: #{tpu_custom_call.1} parent=5 // pred_fallthru
        _
    $region6: #{tpu_custom_call.1} parent=1 // loop_footer
      %s20 = sadd.s32 1, %s16
    $region7: #{tpu_custom_call.1} parent=1 // loop_footer_branch
      %15 = sbr.rel target = $region3
    $region8: #{tpu_custom_call.1} parent=1 // loop_exit
      _
    %625 = vsyncpa [#allocation4], 1
    %s626 = scalar_lea.sflag [#allocation4], 1
    %627 = vsyncpa %s626, 1
    %628 = vsyncpa [#allocation7], 1
    %s629 = scalar_lea.sflag [#allocation7], 1
    %630 = vsyncpa %s629, 1
    %631 = vsyncpa [#allocation5], 1
    %s632 = scalar_lea.sflag [#allocation5], 1
    %633 = vsyncpa %s632, 1

</llo_original>
